<compile_context>
chip_gen: v7x
topology: tpu7x:2x2x1
jax: 0.10.0
libtpu: 0.0.40
codegen_flags: <defaults>
</compile_context>

<pallas_src>
import functools
import math

import jax
import jax.numpy as jnp
import numpy as np
from jax.experimental import pallas as pl
from jax.experimental.pallas import tpu as pltpu


def adaptive_embedding_kernel(idx_ref, *refs, cutoffs_ext):
    """One token tile of the AdaptiveEmbedding forward.

    idx_ref : (T, 1) int32   token ids for this tile
    refs    : emb_0, map_0, emb_1, map_1, ..., out_ref
              emb_ii : (V_ii, D_ii)  cluster embedding table
              map_ii : (E, D_ii)     cluster projection weight, PyTorch (out, in)
    out_ref : (T, E)
    """
    out_ref = refs[-1]
    tables = refs[:-1]
    n_clusters = len(cutoffs_ext) - 1

    idx = idx_ref[...]                                    # (T, 1) int32
    T = idx.shape[0]
    E = out_ref.shape[-1]

    acc = jnp.zeros((T, E), jnp.float32)
    for ii in range(n_clusters):                          # static unroll, few clusters
        lo = cutoffs_ext[ii]
        hi = cutoffs_ext[ii + 1]
        emb = tables[2 * ii][...]                         # (V_ii, D_ii)
        mp = tables[2 * ii + 1][...]                      # (E, D_ii)
        V_ii = emb.shape[0]

        in_cluster = jnp.logical_and(idx >= lo, idx < hi)             # (T, 1)
        rel = idx - lo                                                # (T, 1)
        vocab_pos = jax.lax.broadcasted_iota(jnp.int32, (T, V_ii), 1)
        # Masked one-hot: rows of tokens outside this cluster are all-zero,
        # so their contribution to `acc` is exactly zero (no select needed).
        onehot = jnp.logical_and(vocab_pos == rel, in_cluster).astype(jnp.float32)

        gathered = jnp.dot(onehot, emb,
                           preferred_element_type=jnp.float32)        # (T, D_ii)
        # x @ W.T without materializing a transpose: contract on the last dim
        # of both operands (W is stored PyTorch-style (out_features, in_features)).
        proj = jax.lax.dot_general(
            gathered, mp,
            dimension_numbers=(((1,), (1,)), ((), ())),
            preferred_element_type=jnp.float32)                       # (T, E)
        acc = acc + proj

    out_ref[...] = acc.astype(out_ref.dtype)


def adaptive_embedding(indices, embeddings, mappings, cutoffs, n_classes,
                       n_embeddings, *, tile=8):
    """Pallas wrapper. `indices` may have any shape; returns shape + (E,)."""
    cutoffs_ext = tuple([0] + list(cutoffs) + [n_classes])

    orig_shape = indices.shape
    idx_flat = indices.reshape(-1).astype(jnp.int32)
    n_tokens = idx_flat.shape[0]
    n_pad = ((n_tokens + tile - 1) // tile) * tile
    # Pad with an out-of-range id: produces zero rows, sliced away below.
    idx_flat = jnp.pad(idx_flat, (0, n_pad - n_tokens),
                       constant_values=n_classes)
    idx2d = idx_flat.reshape(n_pad, 1)

    tables = []
    for emb, mp in zip(embeddings, mappings):
        tables.append(emb)
        tables.append(mp)

    def full_spec(arr):
        nd = arr.ndim
        return pl.BlockSpec(arr.shape, lambda i, _nd=nd: (0,) * _nd)

    in_specs = [pl.BlockSpec((tile, 1), lambda i: (i, 0))]
    in_specs += [full_spec(t) for t in tables]
    out_specs = pl.BlockSpec((tile, n_embeddings), lambda i: (i, 0))

    kernel = functools.partial(adaptive_embedding_kernel,
                               cutoffs_ext=cutoffs_ext)
    out = pl.pallas_call(
        kernel,
        out_shape=jax.ShapeDtypeStruct((n_pad, n_embeddings), jnp.float32),
        grid=(n_pad // tile,),
        in_specs=in_specs,
        out_specs=out_specs,
        compiler_params=pltpu.CompilerParams(
            dimension_semantics=("parallel",)),
    )(idx2d, *tables)

    return out[:n_tokens].reshape(*orig_shape, n_embeddings)


# ----------------------------- pure-JAX reference ------------------------------------
def reference_adaptive_embedding(indices, embeddings, mappings, cutoffs,
                                 n_classes, n_embeddings):
    cutoffs_ext = [0] + list(cutoffs) + [n_classes]
    out = jnp.zeros(indices.shape + (n_embeddings,), jnp.float32)
    for ii in range(len(cutoffs_ext) - 1):
        lo, hi = cutoffs_ext[ii], cutoffs_ext[ii + 1]
        mask = jnp.logical_and(indices >= lo, indices < hi)
        rel = jnp.clip(indices - lo, 0, embeddings[ii].shape[0] - 1)
        xx = embeddings[ii][rel]                       # gather
        xx = xx @ mappings[ii].T                       # Linear, no bias
        out = jnp.where(mask[..., None], xx, out)
    return out


def init_params(key, n_classes, cutoffs, n_embeddings, reduction_factor):
    cutoffs_ext = [0] + list(cutoffs) + [n_classes]
    n_clusters = len(cutoffs) + 1
    embeddings, mappings = [], []
    d = n_embeddings
    ks = jax.random.split(key, 2 * n_clusters)
    for ii in range(n_clusters):
        v = cutoffs_ext[ii + 1] - cutoffs_ext[ii]
        embeddings.append(jax.random.normal(ks[2 * ii], (v, d), jnp.float32))
        mappings.append(
            0.1 * jax.random.normal(ks[2 * ii + 1], (n_embeddings, d), jnp.float32))
        d = d // reduction_factor
    return embeddings, mappings


if __name__ == "__main__":
    # small shapes: 3 clusters, vocab 64, E=32, reduction_factor=2 -> dims 32/16/8
    n_classes = 64
    cutoffs = [16, 40]
    n_embeddings = 32
    reduction_factor = 2

    key = jax.random.PRNGKey(0)
    k_idx, k_par = jax.random.split(key)
    indices = jax.random.randint(k_idx, (2, 8), 0, n_classes)   # (batch=2, seq=8)
    embeddings, mappings = init_params(k_par, n_classes, cutoffs,
                                       n_embeddings, reduction_factor)

    out = adaptive_embedding(indices, embeddings, mappings, cutoffs,
                             n_classes, n_embeddings)
    out = jax.block_until_ready(out)

    ref = jax.block_until_ready(
        reference_adaptive_embedding(indices, embeddings, mappings, cutoffs,
                                     n_classes, n_embeddings))
    np.testing.assert_allclose(np.asarray(out), np.asarray(ref),
                               rtol=2e-3, atol=2e-3)
    print("KERNEL_OK")
</pallas_src>

<mosaic_0001>
module attributes {stable_mosaic.version = 11 : i64} {
  func.func @adaptive_embedding_kernel(%arg0: i32, %arg1: memref<8x1xi32, #tpu.memory_space<vmem>>, %arg2: memref<16x32xf32, #tpu.memory_space<vmem>>, %arg3: memref<32x32xf32, #tpu.memory_space<vmem>>, %arg4: memref<24x16xf32, #tpu.memory_space<vmem>>, %arg5: memref<32x16xf32, #tpu.memory_space<vmem>>, %arg6: memref<24x8xf32, #tpu.memory_space<vmem>>, %arg7: memref<32x8xf32, #tpu.memory_space<vmem>>, %arg8: memref<8x32xf32, #tpu.memory_space<vmem>>) attributes {dimension_semantics = [#tpu.dimension_semantics<parallel>], iteration_bounds = array<i64: 2>, scalar_prefetch = 0 : i64, scratch_operands = 0 : i64, tpu.core_type = #tpu.core_type<tc>, window_params = [{transform_indices = @transform_0, window_bounds = array<i64: 8, 1>}, {pipeline_mode = #tpu.pipeline_mode<synchronous>, transform_indices = @transform_1, window_bounds = array<i64: 16, 32>}, {pipeline_mode = #tpu.pipeline_mode<synchronous>, transform_indices = @transform_2, window_bounds = array<i64: 32, 32>}, {pipeline_mode = #tpu.pipeline_mode<synchronous>, transform_indices = @transform_3, window_bounds = array<i64: 24, 16>}, {pipeline_mode = #tpu.pipeline_mode<synchronous>, transform_indices = @transform_4, window_bounds = array<i64: 32, 16>}, {pipeline_mode = #tpu.pipeline_mode<synchronous>, transform_indices = @transform_5, window_bounds = array<i64: 24, 8>}, {pipeline_mode = #tpu.pipeline_mode<synchronous>, transform_indices = @transform_6, window_bounds = array<i64: 32, 8>}, {transform_indices = @transform_7, window_bounds = array<i64: 8, 32>}]} {
    %c0 = arith.constant 0 : index
    %c0_0 = arith.constant 0 : index
    %0 = vector.load %arg1[%c0, %c0_0] : memref<8x1xi32, #tpu.memory_space<vmem>>, vector<8x1xi32>
    %cst = arith.constant 0.000000e+00 : f32
    %1 = vector.broadcast %cst : f32 to vector<8x32xf32>
    %c0_1 = arith.constant 0 : index
    %c0_2 = arith.constant 0 : index
    %2 = vector.load %arg2[%c0_1, %c0_2] : memref<16x32xf32, #tpu.memory_space<vmem>>, vector<16x32xf32>
    %c0_3 = arith.constant 0 : index
    %c0_4 = arith.constant 0 : index
    %3 = vector.load %arg3[%c0_3, %c0_4] : memref<32x32xf32, #tpu.memory_space<vmem>>, vector<32x32xf32>
    %c0_i32 = arith.constant 0 : i32
    %4 = vector.broadcast %c0_i32 : i32 to vector<8x1xi32>
    %5 = arith.cmpi sge, %0, %4 : vector<8x1xi32>
    %c16_i32 = arith.constant 16 : i32
    %6 = vector.broadcast %c16_i32 : i32 to vector<8x1xi32>
    %7 = arith.cmpi slt, %0, %6 : vector<8x1xi32>
    %8 = arith.andi %5, %7 : vector<8x1xi1>
    %c0_i32_5 = arith.constant 0 : i32
    %9 = vector.broadcast %c0_i32_5 : i32 to vector<8x1xi32>
    %10 = arith.subi %0, %9 : vector<8x1xi32>
    %11 = tpu.iota {dimensions = array<i32: 1>} : vector<8x16xi32>
    %12 = vector.broadcast %10 : vector<8x1xi32> to vector<8x16xi32>
    %13 = arith.cmpi eq, %11, %12 : vector<8x16xi32>
    %14 = vector.broadcast %8 : vector<8x1xi1> to vector<8x16xi1>
    %15 = arith.andi %13, %14 : vector<8x16xi1>
    %16 = arith.extui %15 : vector<8x16xi1> to vector<8x16xi32>
    %17 = arith.sitofp %16 : vector<8x16xi32> to vector<8x16xf32>
    %cst_6 = arith.constant dense<0.000000e+00> : vector<8x32xf32>
    %18 = tpu.matmul %17, %2, %cst_6 {dimension_numbers = #tpu.dot_dimension_numbers<[1], [0], [0], [1], [0, 0, 1, 1], [], []>} : vector<8x16xf32>, vector<16x32xf32>, vector<8x32xf32> -> vector<8x32xf32>
    %cst_7 = arith.constant dense<0.000000e+00> : vector<8x32xf32>
    %19 = tpu.matmul %18, %3, %cst_7 {dimension_numbers = #tpu.dot_dimension_numbers<[1], [1], [0], [0], [0, 0, 1, 0], [], []>} : vector<8x32xf32>, vector<32x32xf32>, vector<8x32xf32> -> vector<8x32xf32>
    %20 = arith.addf %1, %19 : vector<8x32xf32>
    %c0_8 = arith.constant 0 : index
    %c0_9 = arith.constant 0 : index
    %21 = vector.load %arg4[%c0_8, %c0_9] : memref<24x16xf32, #tpu.memory_space<vmem>>, vector<24x16xf32>
    %c0_10 = arith.constant 0 : index
    %c0_11 = arith.constant 0 : index
    %22 = vector.load %arg5[%c0_10, %c0_11] : memref<32x16xf32, #tpu.memory_space<vmem>>, vector<32x16xf32>
    %c16_i32_12 = arith.constant 16 : i32
    %23 = vector.broadcast %c16_i32_12 : i32 to vector<8x1xi32>
    %24 = arith.cmpi sge, %0, %23 : vector<8x1xi32>
    %c40_i32 = arith.constant 40 : i32
    %25 = vector.broadcast %c40_i32 : i32 to vector<8x1xi32>
    %26 = arith.cmpi slt, %0, %25 : vector<8x1xi32>
    %27 = arith.andi %24, %26 : vector<8x1xi1>
    %c16_i32_13 = arith.constant 16 : i32
    %28 = vector.broadcast %c16_i32_13 : i32 to vector<8x1xi32>
    %29 = arith.subi %0, %28 : vector<8x1xi32>
    %30 = tpu.iota {dimensions = array<i32: 1>} : vector<8x24xi32>
    %31 = vector.broadcast %29 : vector<8x1xi32> to vector<8x24xi32>
    %32 = arith.cmpi eq, %30, %31 : vector<8x24xi32>
    %33 = vector.broadcast %27 : vector<8x1xi1> to vector<8x24xi1>
    %34 = arith.andi %32, %33 : vector<8x24xi1>
    %35 = arith.extui %34 : vector<8x24xi1> to vector<8x24xi32>
    %36 = arith.sitofp %35 : vector<8x24xi32> to vector<8x24xf32>
    %cst_14 = arith.constant dense<0.000000e+00> : vector<8x16xf32>
    %37 = tpu.matmul %36, %21, %cst_14 {dimension_numbers = #tpu.dot_dimension_numbers<[1], [0], [0], [1], [0, 0, 1, 1], [], []>} : vector<8x24xf32>, vector<24x16xf32>, vector<8x16xf32> -> vector<8x16xf32>
    %cst_15 = arith.constant dense<0.000000e+00> : vector<8x32xf32>
    %38 = tpu.matmul %37, %22, %cst_15 {dimension_numbers = #tpu.dot_dimension_numbers<[1], [1], [0], [0], [0, 0, 1, 0], [], []>} : vector<8x16xf32>, vector<32x16xf32>, vector<8x32xf32> -> vector<8x32xf32>
    %39 = arith.addf %20, %38 : vector<8x32xf32>
    %c0_16 = arith.constant 0 : index
    %c0_17 = arith.constant 0 : index
    %40 = vector.load %arg6[%c0_16, %c0_17] : memref<24x8xf32, #tpu.memory_space<vmem>>, vector<24x8xf32>
    %c0_18 = arith.constant 0 : index
    %c0_19 = arith.constant 0 : index
    %41 = vector.load %arg7[%c0_18, %c0_19] : memref<32x8xf32, #tpu.memory_space<vmem>>, vector<32x8xf32>
    %c40_i32_20 = arith.constant 40 : i32
    %42 = vector.broadcast %c40_i32_20 : i32 to vector<8x1xi32>
    %43 = arith.cmpi sge, %0, %42 : vector<8x1xi32>
    %c64_i32 = arith.constant 64 : i32
    %44 = vector.broadcast %c64_i32 : i32 to vector<8x1xi32>
    %45 = arith.cmpi slt, %0, %44 : vector<8x1xi32>
    %46 = arith.andi %43, %45 : vector<8x1xi1>
    %c40_i32_21 = arith.constant 40 : i32
    %47 = vector.broadcast %c40_i32_21 : i32 to vector<8x1xi32>
    %48 = arith.subi %0, %47 : vector<8x1xi32>
    %49 = tpu.iota {dimensions = array<i32: 1>} : vector<8x24xi32>
    %50 = vector.broadcast %48 : vector<8x1xi32> to vector<8x24xi32>
    %51 = arith.cmpi eq, %49, %50 : vector<8x24xi32>
    %52 = vector.broadcast %46 : vector<8x1xi1> to vector<8x24xi1>
    %53 = arith.andi %51, %52 : vector<8x24xi1>
    %54 = arith.extui %53 : vector<8x24xi1> to vector<8x24xi32>
    %55 = arith.sitofp %54 : vector<8x24xi32> to vector<8x24xf32>
    %cst_22 = arith.constant dense<0.000000e+00> : vector<8x8xf32>
    %56 = tpu.matmul %55, %40, %cst_22 {dimension_numbers = #tpu.dot_dimension_numbers<[1], [0], [0], [1], [0, 0, 1, 1], [], []>} : vector<8x24xf32>, vector<24x8xf32>, vector<8x8xf32> -> vector<8x8xf32>
    %cst_23 = arith.constant dense<0.000000e+00> : vector<8x32xf32>
    %57 = tpu.matmul %56, %41, %cst_23 {dimension_numbers = #tpu.dot_dimension_numbers<[1], [1], [0], [0], [0, 0, 1, 0], [], []>} : vector<8x8xf32>, vector<32x8xf32>, vector<8x32xf32> -> vector<8x32xf32>
    %58 = arith.addf %39, %57 : vector<8x32xf32>
    %c0_24 = arith.constant 0 : index
    %c0_25 = arith.constant 0 : index
    %59 = vector.load %arg8[%c0_24, %c0_25] : memref<8x32xf32, #tpu.memory_space<vmem>>, vector<8x32xf32>
    tpu.vector_store %arg8[%c0_24, %c0_25], %58 {strides = array<i32>} : memref<8x32xf32, #tpu.memory_space<vmem>>, vector<8x32xf32>,
    return
  }
  func.func @transform_0(%arg0: i32) -> (i32, i32) {
    %c0_i32 = arith.constant 0 : i32
    %c0_i32_0 = arith.constant 0 : i32
    return %arg0, %c0_i32 : i32, i32
  }
  func.func @transform_1(%arg0: i32) -> (i32, i32) {
    %c0_i32 = arith.constant 0 : i32
    %c0_i32_0 = arith.constant 0 : i32
    %c0_i32_1 = arith.constant 0 : i32
    return %c0_i32, %c0_i32_0 : i32, i32
  }
  func.func @transform_2(%arg0: i32) -> (i32, i32) {
    %c0_i32 = arith.constant 0 : i32
    %c0_i32_0 = arith.constant 0 : i32
    %c0_i32_1 = arith.constant 0 : i32
    return %c0_i32, %c0_i32_0 : i32, i32
  }
  func.func @transform_3(%arg0: i32) -> (i32, i32) {
    %c0_i32 = arith.constant 0 : i32
    %c0_i32_0 = arith.constant 0 : i32
    %c0_i32_1 = arith.constant 0 : i32
    return %c0_i32, %c0_i32_0 : i32, i32
  }
  func.func @transform_4(%arg0: i32) -> (i32, i32) {
    %c0_i32 = arith.constant 0 : i32
    %c0_i32_0 = arith.constant 0 : i32
    %c0_i32_1 = arith.constant 0 : i32
    return %c0_i32, %c0_i32_0 : i32, i32
  }
  func.func @transform_5(%arg0: i32) -> (i32, i32) {
    %c0_i32 = arith.constant 0 : i32
    %c0_i32_0 = arith.constant 0 : i32
    %c0_i32_1 = arith.constant 0 : i32
    return %c0_i32, %c0_i32_0 : i32, i32
  }
  func.func @transform_6(%arg0: i32) -> (i32, i32) {
    %c0_i32 = arith.constant 0 : i32
    %c0_i32_0 = arith.constant 0 : i32
    %c0_i32_1 = arith.constant 0 : i32
    return %c0_i32, %c0_i32_0 : i32, i32
  }
  func.func @transform_7(%arg0: i32) -> (i32, i32) {
    %c0_i32 = arith.constant 0 : i32
    %c0_i32_0 = arith.constant 0 : i32
    return %arg0, %c0_i32 : i32, i32
  }
}

</mosaic_0001>

<llo_original>
// kernel: tpu_custom_call.1
$region0: #{tpu_custom_call.1}
  #allocation0 [shape = 'u32[]', space=smem, size = 0x4, offset = 0x4, fixed_abs, tag = 'smem constant byte address 0x4 - core index']
  #allocation1 [shape = 'u32[144,128]{1,0:T(1,128)}', space=vmem, size = 0x12000, scoped, tag = 'internal scratch']
  %s0 = inlined_call_operand.vmem [shape: s32[16,1], index: 0, kind: input, shape index: {}]
  %s1 = inlined_call_operand.vmem [shape: f32[16,32], index: 1, kind: input, shape index: {}]
  %s2 = inlined_call_operand.vmem [shape: f32[32,32], index: 2, kind: input, shape index: {}]
  %s3 = inlined_call_operand.vmem [shape: f32[24,16], index: 3, kind: input, shape index: {}]
  %s4 = inlined_call_operand.vmem [shape: f32[32,16], index: 4, kind: input, shape index: {}]
  %s5 = inlined_call_operand.vmem [shape: f32[24,8], index: 5, kind: input, shape index: {}]
  %s6 = inlined_call_operand.vmem [shape: f32[32,8], index: 6, kind: input, shape index: {}]
  %s7 = inlined_call_operand.hbm [shape: f32[16,32], index: 7, kind: output, shape index: {}]
  %s8 = sld [smem:[#allocation0]]
  $region61: #{tpu_custom_call.1} parent=0
    _
  %s10 = ssub.s32 1, %s8
  %s11 = scalar_select 0, %s10, %s8
  $region1: #{tpu_custom_call.1} parent=0
    #allocation2 [shape = 'u8[8192]{0}', space=vmem, size = 0x2000, scoped, tag = 'output window, operand 0']
    #allocation3 [shape = 's32[2]{0}', space=sflag, size = 0x8, scoped, tag = 'scoped memory for tpu_custom_call.1']
    %12 = vsyncpa [#allocation3], 0
    %s13 = scalar_lea.sflag [#allocation3], 1
    %14 = vsyncpa %s13, 0
    loop: start=0, step=1, limit=4
    $region2: #{tpu_custom_call.1} parent=1 // loop_pre_header
      _
    $region3: #{tpu_custom_call.1} parent=1 // loop_header
      %s16 = sphi 0, %s20
      %p17 = scmp.ge.s32.totalorder %s16, 4
      %s26 = sphi 0, %s28
      %s29 = sphi 0, %s26
      %s30 = sphi 0, %s29
      %s46 = sphi 0, %s30
      %s50 = sphi 0, %s50
      %s52 = sphi 0, %s50
      %s53 = sphi 0, %s52
      %s67 = sphi 0, %s53
      %s71 = sphi 0, %s71
      %s73 = sphi 0, %s71
      %s74 = sphi 0, %s73
      %s88 = sphi 0, %s74
      %s92 = sphi 0, %s92
      %s94 = sphi 0, %s92
      %s95 = sphi 0, %s94
      %s109 = sphi 0, %s95
      %s113 = sphi 0, %s113
      %s115 = sphi 0, %s113
      %s116 = sphi 0, %s115
      %s130 = sphi 0, %s116
      %s134 = sphi 0, %s134
      %s136 = sphi 0, %s134
      %s137 = sphi 0, %s136
      %s151 = sphi 0, %s137
      %s155 = sphi 0, %s155
      %s157 = sphi 0, %s155
      %s158 = sphi 0, %s157
      %s172 = sphi 0, %s158
      %s178 = sphi 0, %s180
      %s181 = sphi 0, %s178
      %s182 = sphi 0, %s181
      %s198 = sphi 0, %s182
    $region4: #{tpu_custom_call.1} parent=1 // loop_header_branch
      %19 = sbr.rel (%p17) target = $region8
    $region5: #{tpu_custom_call.1} parent=1 // loop_body
      %s21 = ssub.s32 %s16, 1
      %s22 = ssub.s32 %s16, 2
      %s23 = sadd.s32 %s16, 1
      %s24 = ssub.s32 %s16, %s23
      %p25 = scmp.eq.s32.totalorder %s24, 0
      %s27 = sadd.s32 %s26, 1
      %s28 = scalar_select %p25, %s26, %s27
      %p31 = pneg %p25
      %p32 = scmp.eq.s32.totalorder %s16, 1
      %p33 = por %p31, %p32
      %p34 = scmp.ne.s32.totalorder %s26, %s29
      %p35 = scmp.eq.s32.totalorder %s16, 0
      %p36 = por %p34, %p35
      %p37 = scmp.ne.s32.totalorder %s26, %s29
      %p38 = scmp.eq.s32.totalorder %s21, 1
      %p39 = por %p37, %p38
      %p40 = scmp.ne.s32.totalorder %s29, %s30
      %p41 = scmp.eq.s32.totalorder %s21, 0
      %p42 = por %p40, %p41
      %p43 = scmp.ne.s32.totalorder %s29, %s30
      %p44 = scmp.eq.s32.totalorder %s22, 1
      %p45 = por %p43, %p44
      %p47 = scmp.ne.s32.totalorder %s30, %s46
      %p48 = scmp.eq.s32.totalorder %s22, 0
      %p49 = por %p47, %p48
      %s51 = sadd.s32 %s50, 1
      %p54 = scmp.eq.s32.totalorder %s16, 1
      %p55 = scmp.ne.s32.totalorder %s50, %s52
      %p56 = scmp.eq.s32.totalorder %s16, 0
      %p57 = por %p55, %p56
      %p58 = scmp.ne.s32.totalorder %s50, %s52
      %p59 = scmp.eq.s32.totalorder %s21, 1
      %p60 = por %p58, %p59
      %p61 = scmp.ne.s32.totalorder %s52, %s53
      %p62 = scmp.eq.s32.totalorder %s21, 0
      %p63 = por %p61, %p62
      %p64 = scmp.ne.s32.totalorder %s52, %s53
      %p65 = scmp.eq.s32.totalorder %s22, 1
      %p66 = por %p64, %p65
      %p68 = scmp.ne.s32.totalorder %s53, %s67
      %p69 = scmp.eq.s32.totalorder %s22, 0
      %p70 = por %p68, %p69
      %s72 = sadd.s32 %s71, 1
      %p75 = scmp.eq.s32.totalorder %s16, 1
      %p76 = scmp.ne.s32.totalorder %s71, %s73
      %p77 = scmp.eq.s32.totalorder %s16, 0
      %p78 = por %p76, %p77
      %p79 = scmp.ne.s32.totalorder %s71, %s73
      %p80 = scmp.eq.s32.totalorder %s21, 1
      %p81 = por %p79, %p80
      %p82 = scmp.ne.s32.totalorder %s73, %s74
      %p83 = scmp.eq.s32.totalorder %s21, 0
      %p84 = por %p82, %p83
      %p85 = scmp.ne.s32.totalorder %s73, %s74
      %p86 = scmp.eq.s32.totalorder %s22, 1
      %p87 = por %p85, %p86
      %p89 = scmp.ne.s32.totalorder %s74, %s88
      %p90 = scmp.eq.s32.totalorder %s22, 0
      %p91 = por %p89, %p90
      %s93 = sadd.s32 %s92, 1
      %p96 = scmp.eq.s32.totalorder %s16, 1
      %p97 = scmp.ne.s32.totalorder %s92, %s94
      %p98 = scmp.eq.s32.totalorder %s16, 0
      %p99 = por %p97, %p98
      %p100 = scmp.ne.s32.totalorder %s92, %s94
      %p101 = scmp.eq.s32.totalorder %s21, 1
      %p102 = por %p100, %p101
      %p103 = scmp.ne.s32.totalorder %s94, %s95
      %p104 = scmp.eq.s32.totalorder %s21, 0
      %p105 = por %p103, %p104
      %p106 = scmp.ne.s32.totalorder %s94, %s95
      %p107 = scmp.eq.s32.totalorder %s22, 1
      %p108 = por %p106, %p107
      %p110 = scmp.ne.s32.totalorder %s95, %s109
      %p111 = scmp.eq.s32.totalorder %s22, 0
      %p112 = por %p110, %p111
      %s114 = sadd.s32 %s113, 1
      %p117 = scmp.eq.s32.totalorder %s16, 1
      %p118 = scmp.ne.s32.totalorder %s113, %s115
      %p119 = scmp.eq.s32.totalorder %s16, 0
      %p120 = por %p118, %p119
      %p121 = scmp.ne.s32.totalorder %s113, %s115
      %p122 = scmp.eq.s32.totalorder %s21, 1
      %p123 = por %p121, %p122
      %p124 = scmp.ne.s32.totalorder %s115, %s116
      %p125 = scmp.eq.s32.totalorder %s21, 0
      %p126 = por %p124, %p125
      %p127 = scmp.ne.s32.totalorder %s115, %s116
      %p128 = scmp.eq.s32.totalorder %s22, 1
      %p129 = por %p127, %p128
      %p131 = scmp.ne.s32.totalorder %s116, %s130
      %p132 = scmp.eq.s32.totalorder %s22, 0
      %p133 = por %p131, %p132
      %s135 = sadd.s32 %s134, 1
      %p138 = scmp.eq.s32.totalorder %s16, 1
      %p139 = scmp.ne.s32.totalorder %s134, %s136
      %p140 = scmp.eq.s32.totalorder %s16, 0
      %p141 = por %p139, %p140
      %p142 = scmp.ne.s32.totalorder %s134, %s136
      %p143 = scmp.eq.s32.totalorder %s21, 1
      %p144 = por %p142, %p143
      %p145 = scmp.ne.s32.totalorder %s136, %s137
      %p146 = scmp.eq.s32.totalorder %s21, 0
      %p147 = por %p145, %p146
      %p148 = scmp.ne.s32.totalorder %s136, %s137
      %p149 = scmp.eq.s32.totalorder %s22, 1
      %p150 = por %p148, %p149
      %p152 = scmp.ne.s32.totalorder %s137, %s151
      %p153 = scmp.eq.s32.totalorder %s22, 0
      %p154 = por %p152, %p153
      %s156 = sadd.s32 %s155, 1
      %p159 = scmp.eq.s32.totalorder %s16, 1
      %p160 = scmp.ne.s32.totalorder %s155, %s157
      %p161 = scmp.eq.s32.totalorder %s16, 0
      %p162 = por %p160, %p161
      %p163 = scmp.ne.s32.totalorder %s155, %s157
      %p164 = scmp.eq.s32.totalorder %s21, 1
      %p165 = por %p163, %p164
      %p166 = scmp.ne.s32.totalorder %s157, %s158
      %p167 = scmp.eq.s32.totalorder %s21, 0
      %p168 = por %p166, %p167
      %p169 = scmp.ne.s32.totalorder %s157, %s158
      %p170 = scmp.eq.s32.totalorder %s22, 1
      %p171 = por %p169, %p170
      %p173 = scmp.ne.s32.totalorder %s158, %s172
      %p174 = scmp.eq.s32.totalorder %s22, 0
      %p175 = por %p173, %p174
      %s176 = ssub.s32 %s16, %s23
      %p177 = scmp.eq.s32.totalorder %s176, 0
      %s179 = sadd.s32 %s178, 1
      %s180 = scalar_select %p177, %s178, %s179
      %p183 = pneg %p177
      %p184 = scmp.eq.s32.totalorder %s16, 1
      %p185 = por %p183, %p184
      %p186 = scmp.ne.s32.totalorder %s178, %s181
      %p187 = scmp.eq.s32.totalorder %s16, 0
      %p188 = por %p186, %p187
      %p189 = scmp.ne.s32.totalorder %s178, %s181
      %p190 = scmp.eq.s32.totalorder %s21, 1
      %p191 = por %p189, %p190
      %p192 = scmp.ne.s32.totalorder %s181, %s182
      %p193 = scmp.eq.s32.totalorder %s21, 0
      %p194 = por %p192, %p193
      %p195 = scmp.ne.s32.totalorder %s181, %s182
      %p196 = scmp.eq.s32.totalorder %s22, 1
      %p197 = por %p195, %p196
      %p199 = scmp.ne.s32.totalorder %s182, %s198
      %p200 = scmp.eq.s32.totalorder %s22, 0
      %p201 = por %p199, %p200
      %p202 = scmp.le.s32.totalorder 1, %s16
      %p203 = scmp.lt.s32.totalorder %s16, 3
      %p204 = pnand %p202, %p203
      %p205 = pneg %p204
      // Predicated region
      $region9: #{tpu_custom_call.1} parent=5 // pred_check
        _
      $region10: #{tpu_custom_call.1} parent=5 // pred_check_branch
        %207 = sbr.rel (%p204) target = $region12
      $region11: #{tpu_custom_call.1} parent=5 // pred_region
        %s208 = ssub.s32 %s16, 1
        // Predicated region
        $region13: #{tpu_custom_call.1} parent=11 // pred_check
          %p209 = pneg %p63
        $region14: #{tpu_custom_call.1} parent=11 // pred_check_branch
          %211 = sbr.rel (%p209) target = $region16
        $region15: #{tpu_custom_call.1} parent=11 // pred_region
          _
        $region16: #{tpu_custom_call.1} parent=11 // pred_fallthru
          _
        // Predicated region
        $region17: #{tpu_custom_call.1} parent=11 // pred_check
          %p212 = pneg %p84
        $region18: #{tpu_custom_call.1} parent=11 // pred_check_branch
          %214 = sbr.rel (%p212) target = $region20
        $region19: #{tpu_custom_call.1} parent=11 // pred_region
          _
        $region20: #{tpu_custom_call.1} parent=11 // pred_fallthru
          _
        // Predicated region
        $region21: #{tpu_custom_call.1} parent=11 // pred_check
          %p215 = pneg %p105
        $region22: #{tpu_custom_call.1} parent=11 // pred_check_branch
          %217 = sbr.rel (%p215) target = $region24
        $region23: #{tpu_custom_call.1} parent=11 // pred_region
          _
        $region24: #{tpu_custom_call.1} parent=11 // pred_fallthru
          _
        // Predicated region
        $region25: #{tpu_custom_call.1} parent=11 // pred_check
          %p218 = pneg %p126
        $region26: #{tpu_custom_call.1} parent=11 // pred_check_branch
          %220 = sbr.rel (%p218) target = $region28
        $region27: #{tpu_custom_call.1} parent=11 // pred_region
          _
        $region28: #{tpu_custom_call.1} parent=11 // pred_fallthru
          _
        // Predicated region
        $region29: #{tpu_custom_call.1} parent=11 // pred_check
          %p221 = pneg %p147
        $region30: #{tpu_custom_call.1} parent=11 // pred_check_branch
          %223 = sbr.rel (%p221) target = $region32
        $region31: #{tpu_custom_call.1} parent=11 // pred_region
          _
        $region32: #{tpu_custom_call.1} parent=11 // pred_fallthru
          _
        // Predicated region
        $region33: #{tpu_custom_call.1} parent=11 // pred_check
          %p224 = pneg %p168
        $region34: #{tpu_custom_call.1} parent=11 // pred_check_branch
          %226 = sbr.rel (%p224) target = $region36
        $region35: #{tpu_custom_call.1} parent=11 // pred_region
          _
        $region36: #{tpu_custom_call.1} parent=11 // pred_fallthru
          _
      $region12: #{tpu_custom_call.1} parent=5 // pred_fallthru
        _
      %p227 = scmp.lt.s32.totalorder %s16, 2
      // Predicated region
      $region37: #{tpu_custom_call.1} parent=5 // pred_check
        %p228 = pneg %p227
      $region38: #{tpu_custom_call.1} parent=5 // pred_check_branch
        %230 = sbr.rel (%p228) target = $region40
      $region39: #{tpu_custom_call.1} parent=5 // pred_region
        // Predicated region
        $region41: #{tpu_custom_call.1} parent=39 // pred_check
          %p231 = pneg %p36
        $region42: #{tpu_custom_call.1} parent=39 // pred_check_branch
          %233 = sbr.rel (%p231) target = $region44
        $region43: #{tpu_custom_call.1} parent=39 // pred_region
          %p234 = scmp.lt.s32.totalorder %s16, 1
          %s235 = scalar_select %p234, %s16, 1
          %s236 = smul.addr %s235, 8
          %s237 = scalar_lea.vmem %s0, %s236
        $region44: #{tpu_custom_call.1} parent=39 // pred_fallthru
          _
      $region40: #{tpu_custom_call.1} parent=5 // pred_fallthru
        _
      %p238 = scmp.le.s32.totalorder 1, %s16
      %p239 = scmp.lt.s32.totalorder %s16, 3
      %p240 = pnand %p238, %p239
      %p241 = pneg %p240
      // Predicated region
      $region45: #{tpu_custom_call.1} parent=5 // pred_check
        _
      $region46: #{tpu_custom_call.1} parent=5 // pred_check_branch
        %243 = sbr.rel (%p240) target = $region48
      $region47: #{tpu_custom_call.1} parent=5 // pred_region
        %s244 = ssub.s32 %s16, 1
        %p245 = scmp.lt.s32.totalorder %s21, 1
        %s246 = scalar_select %p245, %s21, 1
        %s247 = smul.addr %s246, 8
        %s248 = scalar_lea.vmem %s0, %s247
        %p249 = pneg %p42
        %p250 = pneg %p39
        %p251 = pneg %p63
        %p252 = pneg %p60
        %p253 = pneg %p84
        %p254 = pneg %p81
        %p255 = pneg %p105
        %p256 = pneg %p102
        %p257 = pneg %p126
        %p258 = pneg %p123
        %p259 = pneg %p147
        %p260 = pneg %p144
        %p261 = pneg %p168
        %p262 = pneg %p165
        %p263 = pneg %p194
        %p264 = pneg %p191
        %s265 = sand.u32 %s181, 1
        %s266 = scalar_lea.sflag [#allocation3], %s265
        %s267 = sand.u32 %s181, 1
        %s268 = smul.addr %s267, 8
        %s269 = scalar_lea.vmem [#allocation2], %s268
        %p270 = scmp.lt.s32.totalorder %s21, 1
        %s271 = scalar_select %p270, %s21, 1
        %s272 = smul.addr %s271, 8
        %s273 = scalar_lea.vmem %s0, %s272
        %v274 = vld [vmem:[%s273] sm:$0xff]
        %v275 = vld [vmem:[%s1] sm:$0xff]
        %v276 = vld [vmem:[%s1 + $0x8] sm:$0xff]
        %v277 = vld [vmem:[%s2] sm:$0xff]
        %v278 = vld [vmem:[%s2 + $0x8] sm:$0xff]
        %v279 = vld [vmem:[%s2 + $0x10] sm:$0xff]
        %v280 = vld [vmem:[%s2 + $0x18] sm:$0xff]
        %vm281 = vcmp.ge.s32.totalorder %v274, 0
        %vm282 = vcmp.lt.s32.totalorder %v274, 16
        %vm283 = vmand %vm281, %vm282
        %v284 = vlaneseq
        %v285 = vand.u32 %v284, 127
        %286 = vset.pattern.permute.xlu0 0
        %287 = vperm.xlu0 %286, %v274
        %v288 = vpop.permute.xlu0 %287
        %vm289 = vcmp.eq.s32.totalorder %v285, %v288
        %v290 = vsel %vm283, 1, 0
        %291 = vset.pattern.permute.xlu0 0
        %292 = vperm.xlu0 %291, %v290
        %v293 = vpop.permute.xlu0 %292
        %vm294 = vcmp.eq.s32.totalorder %v293, 1
        %vm295 = vmand %vm289, %vm294
        %v296 = vsel %vm295, 1, 0
        %v297 = vcvt.s32.f32 %v296
        %vm298 = vcmask 130048
        %v300 = vsel %vm298, %v297, 0
        %302 = vmatprep.subr.mxu0 0.0
        %303 = vmatpush1.msra.mxu0 %v275
        %304 = vmatprep.subr.mxu0 0.0
        %305 = vmatpush1.msra.mxu0 %v276
        %306 = vmatprep.subr.mxu0 0.0
        %307 = vmatpush1.msra.mxu0 0.0
        %308 = vmatprep.subr.mxu0 0.0
        %309 = vmatpush1.msra.mxu0 0.0
        %310 = vmatprep.subr.mxu0 0.0
        %311 = vmatpush1.msra.mxu0 0.0
        %312 = vmatprep.subr.mxu0 0.0
        %313 = vmatpush1.msra.mxu0 0.0
        %314 = vmatprep.subr.mxu0 0.0
        %315 = vmatpush1.msra.mxu0 0.0
        %316 = vmatprep.subr.mxu0 0.0
        %317 = vmatpush1.msra.mxu0 0.0
        %318 = vmatprep.subr.mxu0 0.0
        %319 = vmatpush1.msra.mxu0 0.0
        %320 = vmatprep.subr.mxu0 0.0
        %321 = vmatpush1.msra.mxu0 0.0
        %322 = vmatprep.subr.mxu0 0.0
        %323 = vmatpush1.msra.mxu0 0.0
        %324 = vmatprep.subr.mxu0 0.0
        %325 = vmatpush1.msra.mxu0 0.0
        %326 = vmatprep.subr.mxu0 0.0
        %327 = vmatpush1.msra.mxu0 0.0
        %328 = vmatprep.subr.mxu0 0.0
        %329 = vmatpush1.msra.mxu0 0.0
        %330 = vmatprep.subr.mxu0 0.0
        %331 = vmatpush1.msra.mxu0 0.0
        %332 = vmatprep.subr.mxu0 0.0
        %333 = vmatpush1.msra.mxu0 0.0
        %334 = vmatprep.subr.mxu0 0.0
        %335 = vmatpush1.msra.mxu0 0.0
        %336 = vmatprep.subr.mxu0 0.0
        %337 = vmatpush1.msra.mxu0 0.0
        %338 = vmatprep.subr.mxu0 0.0
        %339 = vmatpush1.msra.mxu0 0.0
        %340 = vmatprep.subr.mxu0 0.0
        %341 = vmatpush1.msra.mxu0 0.0
        %342 = vmatprep.subr.mxu0 0.0
        %343 = vmatpush1.msra.mxu0 0.0
        %344 = vmatprep.subr.mxu0 0.0
        %345 = vmatpush1.msra.mxu0 0.0
        %346 = vmatprep.subr.mxu0 0.0
        %347 = vmatpush1.msra.mxu0 0.0
        %348 = vmatprep.subr.mxu0 0.0
        %349 = vmatpush1.msra.mxu0 0.0
        %350 = vmatprep.subr.mxu0 0.0
        %351 = vmatpush1.msra.mxu0 0.0
        %352 = vmatprep.subr.mxu0 0.0
        %353 = vmatpush1.msra.mxu0 0.0
        %354 = vmatprep.subr.mxu0 0.0
        %355 = vmatpush1.msra.mxu0 0.0
        %356 = vmatprep.subr.mxu0 0.0
        %357 = vmatpush1.msra.mxu0 0.0
        %358 = vmatprep.subr.mxu0 0.0
        %359 = vmatpush1.msra.mxu0 0.0
        %360 = vmatprep.subr.mxu0 0.0
        %361 = vmatpush1.msra.mxu0 0.0
        %362 = vmatprep.subr.mxu0 0.0
        %363 = vmatpush1.msra.mxu0 0.0
        %364 = vmatprep.subr.mxu0 0.0
        %365 = vmatpush1.msra.mxu0 0.0
        %366 = vmatprep.mubr.f32.mxu0 0.0
        %367 = vmatmul.mubr.f32.gmra.mrb[0].mxu0 %v300
        %v368 = vpop.f32.mrb[0].mxu0
        %v369 = vadd.f32 0.0, %v368
        %v370 = vpop.f32.mrb[0].mxu0
        %371 = vdwg.mxu0
        %v372 = vld [vmem:[%s3] sm:$0xff]
        %v373 = vld [vmem:[%s3 + $0x8] sm:$0xff]
        %v374 = vld [vmem:[%s3 + $0x10] sm:$0xff]
        %v375 = vld [vmem:[%s4] sm:$0xff]
        %v376 = vld [vmem:[%s4 + $0x8] sm:$0xff]
        %v377 = vld [vmem:[%s4 + $0x10] sm:$0xff]
        %v378 = vld [vmem:[%s4 + $0x18] sm:$0xff]
        %vm379 = vcmp.ge.s32.totalorder %v274, 16
        %vm380 = vcmp.lt.s32.totalorder %v274, 40
        %vm381 = vmand %vm379, %vm380
        %v382 = vsub.s32 %v274, 16
        %383 = vset.pattern.permute.xlu0 0
        %384 = vperm.xlu0 %383, %v382
        %v385 = vpop.permute.xlu0 %384
        %vm386 = vcmp.eq.s32.totalorder %v285, %v385
        %v387 = vsel %vm381, 1, 0
        %388 = vset.pattern.permute.xlu0 0
        %389 = vperm.xlu0 %388, %v387
        %v390 = vpop.permute.xlu0 %389
        %vm391 = vcmp.eq.s32.totalorder %v390, 1
        %vm392 = vmand %vm386, %vm391
        %v393 = vsel %vm392, 1, 0
        %v394 = vcvt.s32.f32 %v393
        %vm395 = vcmask 195584
        %v397 = vsel %vm395, %v394, 0
        %399 = vmatprep.subr.mxu0 0.0
        %400 = vmatpush1.msra.mxu0 %v372
        %401 = vmatprep.subr.mxu0 0.0
        %402 = vmatpush1.msra.mxu0 %v373
        %403 = vmatprep.subr.mxu0 0.0
        %404 = vmatpush1.msra.mxu0 %v374
        %405 = vmatprep.subr.mxu0 0.0
        %406 = vmatpush1.msra.mxu0 0.0
        %407 = vmatprep.subr.mxu0 0.0
        %408 = vmatpush1.msra.mxu0 0.0
        %409 = vmatprep.subr.mxu0 0.0
        %410 = vmatpush1.msra.mxu0 0.0
        %411 = vmatprep.subr.mxu0 0.0
        %412 = vmatpush1.msra.mxu0 0.0
        %413 = vmatprep.subr.mxu0 0.0
        %414 = vmatpush1.msra.mxu0 0.0
        %415 = vmatprep.subr.mxu0 0.0
        %416 = vmatpush1.msra.mxu0 0.0
        %417 = vmatprep.subr.mxu0 0.0
        %418 = vmatpush1.msra.mxu0 0.0
        %419 = vmatprep.subr.mxu0 0.0
        %420 = vmatpush1.msra.mxu0 0.0
        %421 = vmatprep.subr.mxu0 0.0
        %422 = vmatpush1.msra.mxu0 0.0
        %423 = vmatprep.subr.mxu0 0.0
        %424 = vmatpush1.msra.mxu0 0.0
        %425 = vmatprep.subr.mxu0 0.0
        %426 = vmatpush1.msra.mxu0 0.0
        %427 = vmatprep.subr.mxu0 0.0
        %428 = vmatpush1.msra.mxu0 0.0
        %429 = vmatprep.subr.mxu0 0.0
        %430 = vmatpush1.msra.mxu0 0.0
        %431 = vmatprep.subr.mxu0 0.0
        %432 = vmatpush1.msra.mxu0 0.0
        %433 = vmatprep.subr.mxu0 0.0
        %434 = vmatpush1.msra.mxu0 0.0
        %435 = vmatprep.subr.mxu0 0.0
        %436 = vmatpush1.msra.mxu0 0.0
        %437 = vmatprep.subr.mxu0 0.0
        %438 = vmatpush1.msra.mxu0 0.0
        %439 = vmatprep.subr.mxu0 0.0
        %440 = vmatpush1.msra.mxu0 0.0
        %441 = vmatprep.subr.mxu0 0.0
        %442 = vmatpush1.msra.mxu0 0.0
        %443 = vmatprep.subr.mxu0 0.0
        %444 = vmatpush1.msra.mxu0 0.0
        %445 = vmatprep.subr.mxu0 0.0
        %446 = vmatpush1.msra.mxu0 0.0
        %447 = vmatprep.subr.mxu0 0.0
        %448 = vmatpush1.msra.mxu0 0.0
        %449 = vmatprep.subr.mxu0 0.0
        %450 = vmatpush1.msra.mxu0 0.0
        %451 = vmatprep.subr.mxu0 0.0
        %452 = vmatpush1.msra.mxu0 0.0
        %453 = vmatprep.subr.mxu0 0.0
        %454 = vmatpush1.msra.mxu0 0.0
        %455 = vmatprep.subr.mxu0 0.0
        %456 = vmatpush1.msra.mxu0 0.0
        %457 = vmatprep.subr.mxu0 0.0
        %458 = vmatpush1.msra.mxu0 0.0
        %459 = vmatprep.subr.mxu0 0.0
        %460 = vmatpush1.msra.mxu0 0.0
        %461 = vmatprep.subr.mxu0 0.0
        %462 = vmatpush1.msra.mxu0 0.0
        %463 = vmatprep.mubr.f32.mxu0 0.0
        %464 = vmatmul.mubr.f32.gmra.mrb[0].mxu0 %v397
        %v465 = vpop.f32.mrb[0].mxu0
        %v466 = vadd.f32 0.0, %v465
        %v467 = vpop.f32.mrb[0].mxu0
        %468 = vdwg.mxu0
        %v470 = vsel %vm298, %v466, 0
        %v473 = vsel %vm298, %v375, 0
        %v476 = vsel %vm298, %v376, 0
        %v479 = vsel %vm298, %v377, 0
        %v482 = vsel %vm298, %v378, 0
        %484 = vmatprep.subr.mxu0 0.0
        %485 = vmatpush1.xpose.msra.mxu0 %v473
        %486 = vmatprep.subr.mxu0 0.0
        %487 = vmatpush1.xpose.msra.mxu0 %v476
        %488 = vmatprep.subr.mxu0 0.0
        %489 = vmatpush1.xpose.msra.mxu0 %v479
        %490 = vmatprep.subr.mxu0 0.0
        %491 = vmatpush1.xpose.msra.mxu0 %v482
        %492 = vmatprep.subr.mxu0 0.0
        %493 = vmatpush1.xpose.msra.mxu0 0.0
        %494 = vmatprep.subr.mxu0 0.0
        %495 = vmatpush1.xpose.msra.mxu0 0.0
        %496 = vmatprep.subr.mxu0 0.0
        %497 = vmatpush1.xpose.msra.mxu0 0.0
        %498 = vmatprep.subr.mxu0 0.0
        %499 = vmatpush1.xpose.msra.mxu0 0.0
        %500 = vmatprep.subr.mxu0 0.0
        %501 = vmatpush1.xpose.msra.mxu0 0.0
        %502 = vmatprep.subr.mxu0 0.0
        %503 = vmatpush1.xpose.msra.mxu0 0.0
        %504 = vmatprep.subr.mxu0 0.0
        %505 = vmatpush1.xpose.msra.mxu0 0.0
        %506 = vmatprep.subr.mxu0 0.0
        %507 = vmatpush1.xpose.msra.mxu0 0.0
        %508 = vmatprep.subr.mxu0 0.0
        %509 = vmatpush1.xpose.msra.mxu0 0.0
        %510 = vmatprep.subr.mxu0 0.0
        %511 = vmatpush1.xpose.msra.mxu0 0.0
        %512 = vmatprep.subr.mxu0 0.0
        %513 = vmatpush1.xpose.msra.mxu0 0.0
        %514 = vmatprep.subr.mxu0 0.0
        %515 = vmatpush1.xpose.msra.mxu0 0.0
        %516 = vmatprep.subr.mxu0 0.0
        %517 = vmatpush1.xpose.msra.mxu0 0.0
        %518 = vmatprep.subr.mxu0 0.0
        %519 = vmatpush1.xpose.msra.mxu0 0.0
        %520 = vmatprep.subr.mxu0 0.0
        %521 = vmatpush1.xpose.msra.mxu0 0.0
        %522 = vmatprep.subr.mxu0 0.0
        %523 = vmatpush1.xpose.msra.mxu0 0.0
        %524 = vmatprep.subr.mxu0 0.0
        %525 = vmatpush1.xpose.msra.mxu0 0.0
        %526 = vmatprep.subr.mxu0 0.0
        %527 = vmatpush1.xpose.msra.mxu0 0.0
        %528 = vmatprep.subr.mxu0 0.0
        %529 = vmatpush1.xpose.msra.mxu0 0.0
        %530 = vmatprep.subr.mxu0 0.0
        %531 = vmatpush1.xpose.msra.mxu0 0.0
        %532 = vmatprep.subr.mxu0 0.0
        %533 = vmatpush1.xpose.msra.mxu0 0.0
        %534 = vmatprep.subr.mxu0 0.0
        %535 = vmatpush1.xpose.msra.mxu0 0.0
        %536 = vmatprep.subr.mxu0 0.0
        %537 = vmatpush1.xpose.msra.mxu0 0.0
        %538 = vmatprep.subr.mxu0 0.0
        %539 = vmatpush1.xpose.msra.mxu0 0.0
        %540 = vmatprep.subr.mxu0 0.0
        %541 = vmatpush1.xpose.msra.mxu0 0.0
        %542 = vmatprep.subr.mxu0 0.0
        %543 = vmatpush1.xpose.msra.mxu0 0.0
        %544 = vmatprep.subr.mxu0 0.0
        %545 = vmatpush1.xpose.msra.mxu0 0.0
        %546 = vmatprep.subr.mxu0 0.0
        %547 = vmatpush1.xpose.msra.mxu0 0.0
        %548 = vmatprep.mubr.f32.mxu0 0.0
        %549 = vmatmul.mubr.f32.gmra.mrb[0].mxu0 %v470
        %v550 = vpop.f32.mrb[0].mxu0
        %v551 = vadd.f32 0.0, %v550
        %v552 = vpop.f32.mrb[0].mxu0
        %553 = vdwg.mxu0
        %vm554 = vcmask 261120
        %v556 = vsel %vm554, %v369, 0
        %v559 = vsel %vm554, %v277, 0
        %v562 = vsel %vm554, %v278, 0
        %v565 = vsel %vm554, %v279, 0
        %v568 = vsel %vm554, %v280, 0
        %570 = vmatprep.subr.mxu0 0.0
        %571 = vmatpush1.xpose.msra.mxu0 %v559
        %572 = vmatprep.subr.mxu0 0.0
        %573 = vmatpush1.xpose.msra.mxu0 %v562
        %574 = vmatprep.subr.mxu0 0.0
        %575 = vmatpush1.xpose.msra.mxu0 %v565
        %576 = vmatprep.subr.mxu0 0.0
        %577 = vmatpush1.xpose.msra.mxu0 %v568
        %578 = vmatprep.subr.mxu0 0.0
        %579 = vmatpush1.xpose.msra.mxu0 0.0
        %580 = vmatprep.subr.mxu0 0.0
        %581 = vmatpush1.xpose.msra.mxu0 0.0
        %582 = vmatprep.subr.mxu0 0.0
        %583 = vmatpush1.xpose.msra.mxu0 0.0
        %584 = vmatprep.subr.mxu0 0.0
        %585 = vmatpush1.xpose.msra.mxu0 0.0
        %586 = vmatprep.subr.mxu0 0.0
        %587 = vmatpush1.xpose.msra.mxu0 0.0
        %588 = vmatprep.subr.mxu0 0.0
        %589 = vmatpush1.xpose.msra.mxu0 0.0
        %590 = vmatprep.subr.mxu0 0.0
        %591 = vmatpush1.xpose.msra.mxu0 0.0
        %592 = vmatprep.subr.mxu0 0.0
        %593 = vmatpush1.xpose.msra.mxu0 0.0
        %594 = vmatprep.subr.mxu0 0.0
        %595 = vmatpush1.xpose.msra.mxu0 0.0
        %596 = vmatprep.subr.mxu0 0.0
        %597 = vmatpush1.xpose.msra.mxu0 0.0
        %598 = vmatprep.subr.mxu0 0.0
        %599 = vmatpush1.xpose.msra.mxu0 0.0
        %600 = vmatprep.subr.mxu0 0.0
        %601 = vmatpush1.xpose.msra.mxu0 0.0
        %602 = vmatprep.subr.mxu0 0.0
        %603 = vmatpush1.xpose.msra.mxu0 0.0
        %604 = vmatprep.subr.mxu0 0.0
        %605 = vmatpush1.xpose.msra.mxu0 0.0
        %606 = vmatprep.subr.mxu0 0.0
        %607 = vmatpush1.xpose.msra.mxu0 0.0
        %608 = vmatprep.subr.mxu0 0.0
        %609 = vmatpush1.xpose.msra.mxu0 0.0
        %610 = vmatprep.subr.mxu0 0.0
        %611 = vmatpush1.xpose.msra.mxu0 0.0
        %612 = vmatprep.subr.mxu0 0.0
        %613 = vmatpush1.xpose.msra.mxu0 0.0
        %614 = vmatprep.subr.mxu0 0.0
        %615 = vmatpush1.xpose.msra.mxu0 0.0
        %616 = vmatprep.subr.mxu0 0.0
        %617 = vmatpush1.xpose.msra.mxu0 0.0
        %618 = vmatprep.subr.mxu0 0.0
        %619 = vmatpush1.xpose.msra.mxu0 0.0
        %620 = vmatprep.subr.mxu0 0.0
        %621 = vmatpush1.xpose.msra.mxu0 0.0
        %622 = vmatprep.subr.mxu0 0.0
        %623 = vmatpush1.xpose.msra.mxu0 0.0
        %624 = vmatprep.subr.mxu0 0.0
        %625 = vmatpush1.xpose.msra.mxu0 0.0
        %626 = vmatprep.subr.mxu0 0.0
        %627 = vmatpush1.xpose.msra.mxu0 0.0
        %628 = vmatprep.subr.mxu0 0.0
        %629 = vmatpush1.xpose.msra.mxu0 0.0
        %630 = vmatprep.subr.mxu0 0.0
        %631 = vmatpush1.xpose.msra.mxu0 0.0
        %632 = vmatprep.subr.mxu0 0.0
        %633 = vmatpush1.xpose.msra.mxu0 0.0
        %634 = vmatprep.mubr.f32.mxu0 0.0
        %635 = vmatmul.mubr.f32.gmra.mrb[0].mxu0 %v556
        %v636 = vpop.f32.mrb[0].mxu0
        %v637 = vadd.f32 %v551, %v636
        %v638 = vpop.f32.mrb[0].mxu0
        %639 = vdwg.mxu0
        %v640 = vld [vmem:[%s5] sm:$0xff]
        %v641 = vld [vmem:[%s5 + $0x8] sm:$0xff]
        %v642 = vld [vmem:[%s5 + $0x10] sm:$0xff]
        %v643 = vld [vmem:[%s6] sm:$0xff]
        %v644 = vld [vmem:[%s6 + $0x8] sm:$0xff]
        %v645 = vld [vmem:[%s6 + $0x10] sm:$0xff]
        %v646 = vld [vmem:[%s6 + $0x18] sm:$0xff]
        %vm647 = vcmp.ge.s32.totalorder %v274, 40
        %vm648 = vcmp.lt.s32.totalorder %v274, 64
        %vm649 = vmand %vm647, %vm648
        %v650 = vsub.s32 %v274, 40
        %651 = vset.pattern.permute.xlu0 0
        %652 = vperm.xlu0 %651, %v650
        %v653 = vpop.permute.xlu0 %652
        %vm654 = vcmp.eq.s32.totalorder %v285, %v653
        %v655 = vsel %vm649, 1, 0
        %656 = vset.pattern.permute.xlu0 0
        %657 = vperm.xlu0 %656, %v655
        %v658 = vpop.permute.xlu0 %657
        %vm659 = vcmp.eq.s32.totalorder %v658, 1
        %vm660 = vmand %vm654, %vm659
        %v661 = vsel %vm660, 1, 0
        %v662 = vcvt.s32.f32 %v661
        %v664 = vsel %vm395, %v662, 0
        %666 = vmatprep.subr.mxu0 0.0
        %667 = vmatpush1.msra.mxu0 %v640
        %668 = vmatprep.subr.mxu0 0.0
        %669 = vmatpush1.msra.mxu0 %v641
        %670 = vmatprep.subr.mxu0 0.0
        %671 = vmatpush1.msra.mxu0 %v642
        %672 = vmatprep.subr.mxu0 0.0
        %673 = vmatpush1.msra.mxu0 0.0
        %674 = vmatprep.subr.mxu0 0.0
        %675 = vmatpush1.msra.mxu0 0.0
        %676 = vmatprep.subr.mxu0 0.0
        %677 = vmatpush1.msra.mxu0 0.0
        %678 = vmatprep.subr.mxu0 0.0
        %679 = vmatpush1.msra.mxu0 0.0
        %680 = vmatprep.subr.mxu0 0.0
        %681 = vmatpush1.msra.mxu0 0.0
        %682 = vmatprep.subr.mxu0 0.0
        %683 = vmatpush1.msra.mxu0 0.0
        %684 = vmatprep.subr.mxu0 0.0
        %685 = vmatpush1.msra.mxu0 0.0
        %686 = vmatprep.subr.mxu0 0.0
        %687 = vmatpush1.msra.mxu0 0.0
        %688 = vmatprep.subr.mxu0 0.0
        %689 = vmatpush1.msra.mxu0 0.0
        %690 = vmatprep.subr.mxu0 0.0
        %691 = vmatpush1.msra.mxu0 0.0
        %692 = vmatprep.subr.mxu0 0.0
        %693 = vmatpush1.msra.mxu0 0.0
        %694 = vmatprep.subr.mxu0 0.0
        %695 = vmatpush1.msra.mxu0 0.0
        %696 = vmatprep.subr.mxu0 0.0
        %697 = vmatpush1.msra.mxu0 0.0
        %698 = vmatprep.subr.mxu0 0.0
        %699 = vmatpush1.msra.mxu0 0.0
        %700 = vmatprep.subr.mxu0 0.0
        %701 = vmatpush1.msra.mxu0 0.0
        %702 = vmatprep.subr.mxu0 0.0
        %703 = vmatpush1.msra.mxu0 0.0
        %704 = vmatprep.subr.mxu0 0.0
        %705 = vmatpush1.msra.mxu0 0.0
        %706 = vmatprep.subr.mxu0 0.0
        %707 = vmatpush1.msra.mxu0 0.0
        %708 = vmatprep.subr.mxu0 0.0
        %709 = vmatpush1.msra.mxu0 0.0
        %710 = vmatprep.subr.mxu0 0.0
        %711 = vmatpush1.msra.mxu0 0.0
        %712 = vmatprep.subr.mxu0 0.0
        %713 = vmatpush1.msra.mxu0 0.0
        %714 = vmatprep.subr.mxu0 0.0
        %715 = vmatpush1.msra.mxu0 0.0
        %716 = vmatprep.subr.mxu0 0.0
        %717 = vmatpush1.msra.mxu0 0.0
        %718 = vmatprep.subr.mxu0 0.0
        %719 = vmatpush1.msra.mxu0 0.0
        %720 = vmatprep.subr.mxu0 0.0
        %721 = vmatpush1.msra.mxu0 0.0
        %722 = vmatprep.subr.mxu0 0.0
        %723 = vmatpush1.msra.mxu0 0.0
        %724 = vmatprep.subr.mxu0 0.0
        %725 = vmatpush1.msra.mxu0 0.0
        %726 = vmatprep.subr.mxu0 0.0
        %727 = vmatpush1.msra.mxu0 0.0
        %728 = vmatprep.subr.mxu0 0.0
        %729 = vmatpush1.msra.mxu0 0.0
        %730 = vmatprep.mubr.f32.mxu0 0.0
        %731 = vmatmul.mubr.f32.gmra.mrb[0].mxu0 %v664
        %v732 = vpop.f32.mrb[0].mxu0
        %v733 = vadd.f32 0.0, %v732
        %v734 = vpop.f32.mrb[0].mxu0
        %735 = vdwg.mxu0
        %vm736 = vcmask 64512
        %v738 = vsel %vm736, %v733, 0
        %v741 = vsel %vm736, %v643, 0
        %v744 = vsel %vm736, %v644, 0
        %v747 = vsel %vm736, %v645, 0
        %v750 = vsel %vm736, %v646, 0
        %752 = vmatprep.subr.mxu0 0.0
        %753 = vmatpush1.xpose.msra.mxu0 %v741
        %754 = vmatprep.subr.mxu0 0.0
        %755 = vmatpush1.xpose.msra.mxu0 %v744
        %756 = vmatprep.subr.mxu0 0.0
        %757 = vmatpush1.xpose.msra.mxu0 %v747
        %758 = vmatprep.subr.mxu0 0.0
        %759 = vmatpush1.xpose.msra.mxu0 %v750
        %760 = vmatprep.subr.mxu0 0.0
        %761 = vmatpush1.xpose.msra.mxu0 0.0
        %762 = vmatprep.subr.mxu0 0.0
        %763 = vmatpush1.xpose.msra.mxu0 0.0
        %764 = vmatprep.subr.mxu0 0.0
        %765 = vmatpush1.xpose.msra.mxu0 0.0
        %766 = vmatprep.subr.mxu0 0.0
        %767 = vmatpush1.xpose.msra.mxu0 0.0
        %768 = vmatprep.subr.mxu0 0.0
        %769 = vmatpush1.xpose.msra.mxu0 0.0
        %770 = vmatprep.subr.mxu0 0.0
        %771 = vmatpush1.xpose.msra.mxu0 0.0
        %772 = vmatprep.subr.mxu0 0.0
        %773 = vmatpush1.xpose.msra.mxu0 0.0
        %774 = vmatprep.subr.mxu0 0.0
        %775 = vmatpush1.xpose.msra.mxu0 0.0
        %776 = vmatprep.subr.mxu0 0.0
        %777 = vmatpush1.xpose.msra.mxu0 0.0
        %778 = vmatprep.subr.mxu0 0.0
        %779 = vmatpush1.xpose.msra.mxu0 0.0
        %780 = vmatprep.subr.mxu0 0.0
        %781 = vmatpush1.xpose.msra.mxu0 0.0
        %782 = vmatprep.subr.mxu0 0.0
        %783 = vmatpush1.xpose.msra.mxu0 0.0
        %784 = vmatprep.subr.mxu0 0.0
        %785 = vmatpush1.xpose.msra.mxu0 0.0
        %786 = vmatprep.subr.mxu0 0.0
        %787 = vmatpush1.xpose.msra.mxu0 0.0
        %788 = vmatprep.subr.mxu0 0.0
        %789 = vmatpush1.xpose.msra.mxu0 0.0
        %790 = vmatprep.subr.mxu0 0.0
        %791 = vmatpush1.xpose.msra.mxu0 0.0
        %792 = vmatprep.subr.mxu0 0.0
        %793 = vmatpush1.xpose.msra.mxu0 0.0
        %794 = vmatprep.subr.mxu0 0.0
        %795 = vmatpush1.xpose.msra.mxu0 0.0
        %796 = vmatprep.subr.mxu0 0.0
        %797 = vmatpush1.xpose.msra.mxu0 0.0
        %798 = vmatprep.subr.mxu0 0.0
        %799 = vmatpush1.xpose.msra.mxu0 0.0
        %800 = vmatprep.subr.mxu0 0.0
        %801 = vmatpush1.xpose.msra.mxu0 0.0
        %802 = vmatprep.subr.mxu0 0.0
        %803 = vmatpush1.xpose.msra.mxu0 0.0
        %804 = vmatprep.subr.mxu0 0.0
        %805 = vmatpush1.xpose.msra.mxu0 0.0
        %806 = vmatprep.subr.mxu0 0.0
        %807 = vmatpush1.xpose.msra.mxu0 0.0
        %808 = vmatprep.subr.mxu0 0.0
        %809 = vmatpush1.xpose.msra.mxu0 0.0
        %810 = vmatprep.subr.mxu0 0.0
        %811 = vmatpush1.xpose.msra.mxu0 0.0
        %812 = vmatprep.subr.mxu0 0.0
        %813 = vmatpush1.xpose.msra.mxu0 0.0
        %814 = vmatprep.subr.mxu0 0.0
        %815 = vmatpush1.xpose.msra.mxu0 0.0
        %816 = vmatprep.mubr.f32.mxu0 0.0
        %817 = vmatmul.mubr.f32.gmra.mrb[0].mxu0 %v738
        %v818 = vpop.f32.mrb[0].mxu0
        %v819 = vadd.f32 0.0, %v818
        %v820 = vpop.f32.mrb[0].mxu0
        %821 = vdwg.mxu0
        %v822 = vadd.f32 %v637, %v819
        %823 = vst.msk [vmem:[%s269] sm:$0xff] %vm554, %v822
        %s824 = sand.u32 %s181, 1
        %s825 = scalar_lea.sflag [#allocation3], %s824
        %s826 = sand.u32 %s181, 1
        %s827 = smul.addr %s826, 8
        %s828 = scalar_lea.vmem [#allocation2], %s827
        // Predicated region
        $region49: #{tpu_custom_call.1} parent=47 // pred_check
          %p829 = pneg %p191
        $region50: #{tpu_custom_call.1} parent=47 // pred_check_branch
          %831 = sbr.rel (%p829) target = $region52
        $region51: #{tpu_custom_call.1} parent=47 // pred_region
          %s833 = ssub.s32 128, 128
          %834 = vsyncadd %s825, %s833
          %s835 = smul.addr %s21, 128
          %s836 = scalar_lea.hbm %s7, %s835
          %s838 = sshll.u32 %s828, 4
          %s839 = int_to_ptr.vmem [resolvable:$true] %s838
          %841 = dma.vmem_to_hbm [thread:$0]  %s839, 128, %s836, %s825
        $region52: #{tpu_custom_call.1} parent=47 // pred_fallthru
          _
      $region48: #{tpu_custom_call.1} parent=5 // pred_fallthru
        _
      %p842 = scmp.le.s32.totalorder 2, %s16
      // Predicated region
      $region53: #{tpu_custom_call.1} parent=5 // pred_check
        %p843 = pneg %p842
      $region54: #{tpu_custom_call.1} parent=5 // pred_check_branch
        %845 = sbr.rel (%p843) target = $region56
      $region55: #{tpu_custom_call.1} parent=5 // pred_region
        %s846 = ssub.s32 %s16, 2
        // Predicated region
        $region57: #{tpu_custom_call.1} parent=55 // pred_check
          %p847 = pneg %p197
        $region58: #{tpu_custom_call.1} parent=55 // pred_check_branch
          %849 = sbr.rel (%p847) target = $region60
        $region59: #{tpu_custom_call.1} parent=55 // pred_region
          %s850 = sand.u32 %s182, 1
          %s851 = scalar_lea.sflag [#allocation3], %s850
          %s852 = sand.u32 %s182, 1
          %s853 = smul.addr %s852, 8
          %s854 = scalar_lea.vmem [#allocation2], %s853
          %855 = dma.done %s851, 128
        $region60: #{tpu_custom_call.1} parent=55 // pred_fallthru
          _
      $region56: #{tpu_custom_call.1} parent=5 // pred_fallthru
        _
    $region6: #{tpu_custom_call.1} parent=1 // loop_footer
      %s20 = sadd.s32 1, %s16
    $region7: #{tpu_custom_call.1} parent=1 // loop_footer_branch
      %15 = sbr.rel target = $region3
    $region8: #{tpu_custom_call.1} parent=1 // loop_exit
      _
    %856 = vsyncpa [#allocation3], 1
    %s857 = scalar_lea.sflag [#allocation3], 1
    %858 = vsyncpa %s857, 1

</llo_original>
